<compile_context>
chip_gen: v5e
topology: v5e:2x2
jax: 0.10.0
libtpu: 0.0.40
codegen_flags: <defaults>
</compile_context>

<pallas_src>
import jax
import jax.numpy as jnp
from jax.experimental import pallas as pl
from jax.experimental.pallas import tpu as pltpu

IN_FEAT = 4
OUT_FEAT = 32
HIDDEN = 128
B = 2
N = 8          # == bn (number of points / BatchNorm1d channels)
BN_EPS = 1e-5


def point_emb_kernel(x_ref, w_ref, b_ref, gamma_ref, beta_ref, out_ref):
    """x_ref: (B*N, IN_FEAT); w_ref: (IN_FEAT, OUT_FEAT); b_ref: (1, OUT_FEAT);
    gamma_ref/beta_ref: (N, 1); out_ref: (B*N, OUT_FEAT).
    Rows are batch-major: row = b*N + n, where n is the BatchNorm channel."""
    x = x_ref[...]

    # Folded 4-layer MLP: a single affine map on the MXU.
    y = jnp.dot(x, w_ref[...], preferred_element_type=jnp.float32) + b_ref[...]

    # BatchNorm1d(N) training-mode statistics: per channel n, over (batch, feature).
    inv_count = 1.0 / (B * OUT_FEAT)
    row_sum = jnp.sum(y, axis=-1, keepdims=True)               # (B*N, 1) lane reduce
    ch_sum = row_sum[:N, :]
    for bi in range(1, B):                                      # static, tiny VPU adds
        ch_sum = ch_sum + row_sum[bi * N:(bi + 1) * N, :]
    ch_mean = ch_sum * inv_count                                # (N, 1)

    mean_rows = jnp.tile(ch_mean, (B, 1))                       # (B*N, 1)
    d = y - mean_rows
    row_sq = jnp.sum(d * d, axis=-1, keepdims=True)             # (B*N, 1) lane reduce
    ch_sq = row_sq[:N, :]
    for bi in range(1, B):
        ch_sq = ch_sq + row_sq[bi * N:(bi + 1) * N, :]
    ch_var = ch_sq * inv_count                                  # biased variance, (N, 1)

    # Fold gamma/beta into one scale/shift per channel.
    scale_ch = gamma_ref[...] * jax.lax.rsqrt(ch_var + BN_EPS)  # (N, 1)
    shift_ch = beta_ref[...] - ch_mean * scale_ch               # (N, 1)
    scale_rows = jnp.tile(scale_ch, (B, 1))                     # (B*N, 1)
    shift_rows = jnp.tile(shift_ch, (B, 1))

    out_ref[...] = (y * scale_rows + shift_rows).astype(out_ref.dtype)


def point_emb_forward(x, params):
    (w1, b1, w2, b2, w3, b3, w4, b4, gamma, beta) = params
    b_, n_, f_ = x.shape

    # fc1..fc4 have no nonlinearities between them -> fold into one affine map.
    # (tiny one-off XLA matmuls on (4,128)/(128,128)/(128,32) outside the kernel)
    w_eff = w1 @ w2 @ w3 @ w4                                   # (IN_FEAT, OUT_FEAT)
    b_eff = ((b1 @ w2 + b2) @ w3 + b3) @ w4 + b4                # (OUT_FEAT,)

    x2d = x.reshape(b_ * n_, f_)
    vmem = pl.BlockSpec(memory_space=pltpu.MemorySpace.VMEM)
    y_bn = pl.pallas_call(
        point_emb_kernel,
        out_shape=jax.ShapeDtypeStruct((b_ * n_, OUT_FEAT), jnp.float32),
        in_specs=[vmem] * 5,
        out_specs=vmem,
    )(x2d, w_eff, b_eff.reshape(1, OUT_FEAT),
      gamma.reshape(n_, 1), beta.reshape(n_, 1))

    # Passthrough concat is pure data movement -> leave it to XLA (perf review).
    return jnp.concatenate([x, y_bn.reshape(b_, n_, OUT_FEAT)], axis=-1)


def init_params(key):
    ks = jax.random.split(key, 4)

    def lin(k, fan_in, fan_out):
        kw, kb = jax.random.split(k)
        bound = 1.0 / jnp.sqrt(fan_in)
        w = jax.random.uniform(kw, (fan_in, fan_out), jnp.float32, -bound, bound)
        b = jax.random.uniform(kb, (fan_out,), jnp.float32, -bound, bound)
        return w, b

    w1, b1 = lin(ks[0], IN_FEAT, HIDDEN)
    w2, b2 = lin(ks[1], HIDDEN, HIDDEN)
    w3, b3 = lin(ks[2], HIDDEN, HIDDEN)
    w4, b4 = lin(ks[3], HIDDEN, OUT_FEAT)
    gamma = jnp.ones((N,), jnp.float32)     # BatchNorm1d default weight init
    beta = jnp.zeros((N,), jnp.float32)     # BatchNorm1d default bias init
    return (w1, b1, w2, b2, w3, b3, w4, b4, gamma, beta)


def reference_forward(x, params):
    (w1, b1, w2, b2, w3, b3, w4, b4, gamma, beta) = params
    h = x @ w1 + b1
    h = h @ w2 + b2
    h = h @ w3 + b3
    y = h @ w4 + b4
    mean = jnp.mean(y, axis=(0, 2), keepdims=True)
    var = jnp.mean((y - mean) ** 2, axis=(0, 2), keepdims=True)
    y_bn = (y - mean) / jnp.sqrt(var + BN_EPS) * gamma[None, :, None] \
        + beta[None, :, None]
    return jnp.concatenate([x, y_bn], axis=-1)


if __name__ == "__main__":
    key = jax.random.PRNGKey(0)
    kx, kp = jax.random.split(key)
    x = jax.random.normal(kx, (B, N, IN_FEAT), jnp.float32)
    params = init_params(kp)

    out = point_emb_forward(x, params)
    out = jax.block_until_ready(out)

    ref = reference_forward(x, params)
    assert out.shape == (B, N, IN_FEAT + OUT_FEAT), out.shape
    # Slightly looser tolerance: folding fc1..fc4 changes f32 rounding order.
    assert jnp.allclose(out, ref, atol=5e-4, rtol=5e-4), \
        f"max err {jnp.max(jnp.abs(out - ref))}"
    print("KERNEL_OK")
</pallas_src>

<mosaic_0001>
module attributes {stable_mosaic.version = 11 : i64} {
  func.func @point_emb_kernel(%arg0: memref<16x4xf32, #tpu.memory_space<vmem>>, %arg1: memref<4x32xf32, #tpu.memory_space<vmem>>, %arg2: memref<1x32xf32, #tpu.memory_space<vmem>>, %arg3: memref<8x1xf32, #tpu.memory_space<vmem>>, %arg4: memref<8x1xf32, #tpu.memory_space<vmem>>, %arg5: memref<16x32xf32, #tpu.memory_space<vmem>>) attributes {dimension_semantics = [], scalar_prefetch = 0 : i64, scratch_operands = 0 : i64, tpu.core_type = #tpu.core_type<tc>} {
    %c0 = arith.constant 0 : index
    %c0_0 = arith.constant 0 : index
    %0 = vector.load %arg0[%c0, %c0_0] : memref<16x4xf32, #tpu.memory_space<vmem>>, vector<16x4xf32>
    %c0_1 = arith.constant 0 : index
    %c0_2 = arith.constant 0 : index
    %1 = vector.load %arg1[%c0_1, %c0_2] : memref<4x32xf32, #tpu.memory_space<vmem>>, vector<4x32xf32>
    %cst = arith.constant dense<0.000000e+00> : vector<16x32xf32>
    %2 = tpu.matmul %0, %1, %cst {dimension_numbers = #tpu.dot_dimension_numbers<[1], [0], [0], [1], [0, 0, 1, 1], [], []>} : vector<16x4xf32>, vector<4x32xf32>, vector<16x32xf32> -> vector<16x32xf32>
    %c0_3 = arith.constant 0 : index
    %c0_4 = arith.constant 0 : index
    %3 = vector.load %arg2[%c0_3, %c0_4] : memref<1x32xf32, #tpu.memory_space<vmem>>, vector<1x32xf32>
    %4 = vector.broadcast %3 : vector<1x32xf32> to vector<16x32xf32>
    %5 = arith.addf %2, %4 : vector<16x32xf32>
    %cst_5 = arith.constant dense<0.000000e+00> : vector<16xf32>
    %6 = vector.multi_reduction <add>, %5, %cst_5 [1] : vector<16x32xf32> to vector<16xf32>
    %7 = vector.shape_cast %6 : vector<16xf32> to vector<16x1xf32>
    %8 = vector.extract_strided_slice %7 {offsets = [0, 0], sizes = [8, 1], strides = [1, 1]} : vector<16x1xf32> to vector<8x1xf32>
    %9 = vector.extract_strided_slice %7 {offsets = [8, 0], sizes = [8, 1], strides = [1, 1]} : vector<16x1xf32> to vector<8x1xf32>
    %10 = arith.addf %8, %9 : vector<8x1xf32>
    %cst_6 = arith.constant 1.562500e-02 : f32
    %11 = vector.broadcast %cst_6 : f32 to vector<8x1xf32>
    %12 = arith.mulf %10, %11 : vector<8x1xf32>
    %13 = tpu.concatenate %12, %12 in 0 : vector<8x1xf32>, vector<8x1xf32> -> vector<16x1xf32>
    %14 = vector.broadcast %13 : vector<16x1xf32> to vector<16x32xf32>
    %15 = arith.subf %5, %14 : vector<16x32xf32>
    %16 = arith.mulf %15, %15 : vector<16x32xf32>
    %cst_7 = arith.constant dense<0.000000e+00> : vector<16xf32>
    %17 = vector.multi_reduction <add>, %16, %cst_7 [1] : vector<16x32xf32> to vector<16xf32>
    %18 = vector.shape_cast %17 : vector<16xf32> to vector<16x1xf32>
    %19 = vector.extract_strided_slice %18 {offsets = [0, 0], sizes = [8, 1], strides = [1, 1]} : vector<16x1xf32> to vector<8x1xf32>
    %20 = vector.extract_strided_slice %18 {offsets = [8, 0], sizes = [8, 1], strides = [1, 1]} : vector<16x1xf32> to vector<8x1xf32>
    %21 = arith.addf %19, %20 : vector<8x1xf32>
    %cst_8 = arith.constant 1.562500e-02 : f32
    %22 = vector.broadcast %cst_8 : f32 to vector<8x1xf32>
    %23 = arith.mulf %21, %22 : vector<8x1xf32>
    %c0_9 = arith.constant 0 : index
    %c0_10 = arith.constant 0 : index
    %24 = vector.load %arg3[%c0_9, %c0_10] : memref<8x1xf32, #tpu.memory_space<vmem>>, vector<8x1xf32>
    %cst_11 = arith.constant 9.99999974E-6 : f32
    %25 = vector.broadcast %cst_11 : f32 to vector<8x1xf32>
    %26 = arith.addf %23, %25 : vector<8x1xf32>
    %27 = math.rsqrt %26 : vector<8x1xf32>
    %28 = arith.mulf %24, %27 : vector<8x1xf32>
    %c0_12 = arith.constant 0 : index
    %c0_13 = arith.constant 0 : index
    %29 = vector.load %arg4[%c0_12, %c0_13] : memref<8x1xf32, #tpu.memory_space<vmem>>, vector<8x1xf32>
    %30 = arith.mulf %12, %28 : vector<8x1xf32>
    %31 = arith.subf %29, %30 : vector<8x1xf32>
    %32 = tpu.concatenate %28, %28 in 0 : vector<8x1xf32>, vector<8x1xf32> -> vector<16x1xf32>
    %33 = tpu.concatenate %31, %31 in 0 : vector<8x1xf32>, vector<8x1xf32> -> vector<16x1xf32>
    %34 = vector.broadcast %32 : vector<16x1xf32> to vector<16x32xf32>
    %35 = arith.mulf %5, %34 : vector<16x32xf32>
    %36 = vector.broadcast %33 : vector<16x1xf32> to vector<16x32xf32>
    %37 = arith.addf %35, %36 : vector<16x32xf32>
    %c0_14 = arith.constant 0 : index
    %c0_15 = arith.constant 0 : index
    %38 = vector.load %arg5[%c0_14, %c0_15] : memref<16x32xf32, #tpu.memory_space<vmem>>, vector<16x32xf32>
    tpu.vector_store %arg5[%c0_14, %c0_15], %37 {strides = array<i32>} : memref<16x32xf32, #tpu.memory_space<vmem>>, vector<16x32xf32>,
    return
  }
}

</mosaic_0001>

<llo_original>
// kernel: tpu_custom_call.1
$region0: #{tpu_custom_call.1}
  #allocation0 [shape = 'u32[]', space=smem, size = 0x4, offset = 0x4, fixed_abs, tag = 'smem constant byte address 0x4 - core index']
  #allocation1 [shape = 'u32[72,128]{1,0:T(1,128)}', space=vmem, size = 0x9000, scoped, tag = 'internal scratch']
  %s0 = inlined_call_operand.vmem [shape: f32[16,4], index: 0, kind: input, shape index: {}]
  %s1 = inlined_call_operand.vmem [shape: f32[4,32], index: 1, kind: input, shape index: {}]
  %s2 = inlined_call_operand.vmem [shape: f32[1,32], index: 2, kind: input, shape index: {}]
  %s3 = inlined_call_operand.vmem [shape: f32[8,1], index: 3, kind: input, shape index: {}]
  %s4 = inlined_call_operand.vmem [shape: f32[8,1], index: 4, kind: input, shape index: {}]
  %s5 = inlined_call_operand.hbm [shape: f32[16,32], index: 5, kind: output, shape index: {}]
  %s6 = sld [smem:[#allocation0]]
  $region30: #{tpu_custom_call.1} parent=0
    _
  %s8 = ssub.s32 1, %s6
  %s9 = scalar_select 0, %s8, %s6
  $region1: #{tpu_custom_call.1} parent=0
    #allocation2 [shape = 'u8[8192]{0}', space=vmem, size = 0x2000, scoped, tag = 'output window, operand 0, single buffered']
    #allocation3 [shape = 's32[1]{0}', space=sflag, size = 0x4, scoped, tag = 'scoped memory for tpu_custom_call.1']
    %10 = vsyncpa [#allocation3], 0
    // Predicated region
    $region2: #{tpu_custom_call.1} parent=1 // pred_check
      _
    $region3: #{tpu_custom_call.1} parent=1 // pred_check_branch
      %12 = sbr.rel (0) target = $region5
    $region4: #{tpu_custom_call.1} parent=1 // pred_region
      _
    $region5: #{tpu_custom_call.1} parent=1 // pred_fallthru
      _
    // Predicated region
    $region6: #{tpu_custom_call.1} parent=1 // pred_check
      _
    $region7: #{tpu_custom_call.1} parent=1 // pred_check_branch
      %14 = sbr.rel (0) target = $region9
    $region8: #{tpu_custom_call.1} parent=1 // pred_region
      _
    $region9: #{tpu_custom_call.1} parent=1 // pred_fallthru
      _
    // Predicated region
    $region10: #{tpu_custom_call.1} parent=1 // pred_check
      _
    $region11: #{tpu_custom_call.1} parent=1 // pred_check_branch
      %16 = sbr.rel (0) target = $region13
    $region12: #{tpu_custom_call.1} parent=1 // pred_region
      _
    $region13: #{tpu_custom_call.1} parent=1 // pred_fallthru
      _
    // Predicated region
    $region14: #{tpu_custom_call.1} parent=1 // pred_check
      _
    $region15: #{tpu_custom_call.1} parent=1 // pred_check_branch
      %18 = sbr.rel (0) target = $region17
    $region16: #{tpu_custom_call.1} parent=1 // pred_region
      _
    $region17: #{tpu_custom_call.1} parent=1 // pred_fallthru
      _
    // Predicated region
    $region18: #{tpu_custom_call.1} parent=1 // pred_check
      _
    $region19: #{tpu_custom_call.1} parent=1 // pred_check_branch
      %20 = sbr.rel (0) target = $region21
    $region20: #{tpu_custom_call.1} parent=1 // pred_region
      _
    $region21: #{tpu_custom_call.1} parent=1 // pred_fallthru
      _
    %v21 = vld [vmem:[%s0] sm:$0xff]
    %v22 = vld [vmem:[%s0 + $0x8] sm:$0xff]
    %v23 = vld [vmem:[%s1] sm:$0xf]
    %v24 = vld [vmem:[%s2] sm:$0x1]
    %v26 = vperm.slane %v24, 0
    %vm28 = vcmask 31744
    %v30 = vsel %vm28, %v21, 0
    %v33 = vsel %vm28, %v22, 0
    %vm35 = vcmask 1043456
    %v37 = vsel %vm35, %v23, 0
    %39 = vmatpush.msra.mxu0 0.0
    %40 = vmatpush.msra.mxu0 0.0
    %41 = vmatpush.msra.mxu0 0.0
    %42 = vmatpush.msra.mxu0 0.0
    %43 = vmatpush.msra.mxu0 0.0
    %44 = vmatpush.msra.mxu0 0.0
    %45 = vmatpush.msra.mxu0 0.0
    %46 = vmatpush.msra.mxu0 0.0
    %47 = vmatpush.msra.mxu0 0.0
    %48 = vmatpush.msra.mxu0 0.0
    %49 = vmatpush.msra.mxu0 0.0
    %50 = vmatpush.msra.mxu0 0.0
    %51 = vmatpush.msra.mxu0 0.0
    %52 = vmatpush.msra.mxu0 0.0
    %53 = vmatpush.msra.mxu0 0.0
    %54 = vmatpush.msra.mxu0 %v37
    %55 = vmatmul.f32.gmra.mxu0 %v30
    %v56 = vpop.f32.mrf.mxu0
    %v57 = vadd.f32 %v26, %v56
    %58 = vmatmul.f32.gmra.mxu0 %v33
    %v59 = vpop.f32.mrf.mxu0
    %v60 = vadd.f32 %v26, %v59
    %61 = vdwg.mxu0
    %vm62 = vcmask 261120
    %v63 = vsel %vm62, %v57, 0.0
    %64 = vadd.xlane.f32.xlu0 %v63
    %v65 = vpop.xlane.xlu0 %64
    %v66 = vsel %vm62, %v60, 0.0
    %67 = vadd.xlane.f32.xlu0 %v66
    %v68 = vpop.xlane.xlu0 %67
    %v69 = vadd.f32 %v65, %v68
    %v70 = vmul.f32 %v69, 0.015625
    %72 = vset.pattern.permute.xlu0 0
    %73 = vperm.xlu0 %72, %v70
    %v74 = vpop.permute.xlu0 %73
    %v76 = vsub.f32 %v57, %v74
    %v77 = vsub.f32 %v60, %v74
    %v78 = vmul.f32 %v76, %v76
    %v79 = vmul.f32 %v77, %v77
    %v80 = vsel %vm62, %v78, 0.0
    %81 = vadd.xlane.f32.xlu0 %v80
    %v82 = vpop.xlane.xlu0 %81
    %v83 = vsel %vm62, %v79, 0.0
    %84 = vadd.xlane.f32.xlu0 %v83
    %v85 = vpop.xlane.xlu0 %84
    %v86 = vadd.f32 %v82, %v85
    %v87 = vmul.f32 %v86, 0.015625
    %v88 = vld [vmem:[%s3] sm:$0xff]
    %v89 = vadd.f32 %v87, 1e-05
    %v90 = vrsqrt.pop %v89
    %v91 = vmul.f32 %v90, %v89
    %v92 = vmul.f32 %v91, %v90
    %v93 = vmul.f32 0.5, %v92
    %v94 = vsub.f32 1.5, %v93
    %v95 = vmul.f32 %v90, %v94
    %vm96 = vweird.f32 %v89
    %vm97 = vweird.f32 %v90
    %vm98 = vmor %vm96, %vm97
    %v99 = vsel %vm98, %v90, %v95
    %v100 = vmul.f32 %v88, %v99
    %v101 = vld [vmem:[%s4] sm:$0xff]
    %v102 = vmul.f32 %v70, %v100
    %v103 = vsub.f32 %v101, %v102
    %105 = vset.pattern.permute.xlu0 0
    %106 = vperm.xlu0 %105, %v100
    %v107 = vpop.permute.xlu0 %106
    %v109 = vmul.f32 %v57, %v107
    %v110 = vmul.f32 %v60, %v107
    %112 = vset.pattern.permute.xlu0 0
    %113 = vperm.xlu0 %112, %v103
    %v114 = vpop.permute.xlu0 %113
    %v116 = vadd.f32 %v109, %v114
    %v117 = vadd.f32 %v110, %v114
    %118 = vst.msk [vmem:[#allocation2] sm:$0xff] %vm62, %v116
    %119 = vst.msk [vmem:[#allocation2 + $0x8] sm:$0xff] %vm62, %v117
    // Predicated region
    $region22: #{tpu_custom_call.1} parent=1 // pred_check
      _
    $region23: #{tpu_custom_call.1} parent=1 // pred_check_branch
      %121 = sbr.rel (0) target = $region25
    $region24: #{tpu_custom_call.1} parent=1 // pred_region
      %123 = vsyncadd [#allocation3], 0
      %s124 = sshll.u32 [#allocation2], 4
      %s125 = int_to_ptr.vmem [resolvable:$true] %s124
      %s126 = sshll.u32 %s5, 4
      %s127 = int_to_ptr.hbm [resolvable:$true] %s126
      %132 = dma.vmem_to_hbm [thread:$0]  %s125, 256, %s127, [#allocation3], 128, 128, 8
    $region25: #{tpu_custom_call.1} parent=1 // pred_fallthru
      _
    // Predicated region
    $region26: #{tpu_custom_call.1} parent=1 // pred_check
      _
    $region27: #{tpu_custom_call.1} parent=1 // pred_check_branch
      %134 = sbr.rel (0) target = $region29
    $region28: #{tpu_custom_call.1} parent=1 // pred_region
      %136 = dma.done [#allocation3], 256
    $region29: #{tpu_custom_call.1} parent=1 // pred_fallthru
      _
    %137 = vsyncpa [#allocation3], 1

</llo_original>
